<compile_context>
chip_gen: v5e
topology: v5e:2x2
jax: 0.10.0
libtpu: 0.0.40
codegen_flags: <defaults>
</compile_context>

<pallas_src>
import functools

import jax
import jax.numpy as jnp
from jax.experimental import pallas as pl
from jax.experimental.pallas import tpu as pltpu

BN_EPS = 1e-5
LANE = 128
SUBLANE = 8


def _round_up(x, m):
    return ((x + m - 1) // m) * m


def _cdiv(a, b):
    return -(-a // b)


def _mlp_kernel(x_ref, w1_ref, b1_ref, w2_ref, b2_ref, w3_ref, b3_ref, o_ref):
    """One batch tile: 3x (bf16 MXU matmul, f32 accumulate, bias [+ReLU]).

    BatchNorm is already folded into (w1, b1) by the wrapper, so the kernel
    body is pure matmul + VPU elementwise.
    """
    x = x_ref[...].astype(jnp.bfloat16)                       # [tb, d_in]

    h1 = jnp.dot(x, w1_ref[...],
                 preferred_element_type=jnp.float32) + b1_ref[...]
    h1 = jnp.maximum(h1, 0.0)                                 # [tb, h_pad] f32

    h2 = jnp.dot(h1.astype(jnp.bfloat16), w2_ref[...],
                 preferred_element_type=jnp.float32) + b2_ref[...]
    h2 = jnp.maximum(h2, 0.0)

    out = jnp.dot(h2.astype(jnp.bfloat16), w3_ref[...],
                  preferred_element_type=jnp.float32) + b3_ref[...]
    o_ref[...] = out.astype(o_ref.dtype)                      # [tb, out_dim]


def _choose_batch_tiling(B, tile_b):
    """Pick (tile rows, n_tiles, padded batch): even split, multiple-of-8 rows,
    and >=2 (even) tiles when possible so v7x's two TensorCores both work."""
    b8 = _round_up(B, SUBLANE)
    tb = min(_round_up(tile_b, SUBLANE), b8)
    n_tiles = _cdiv(b8, tb)
    if n_tiles == 1 and b8 >= 2 * SUBLANE:
        n_tiles = 2
    elif n_tiles > 2 and n_tiles % 2 == 1:
        n_tiles += 1
    tb = _round_up(_cdiv(b8, n_tiles), SUBLANE)
    n_tiles = _cdiv(b8, tb)
    return tb, n_tiles, tb * n_tiles


@functools.partial(jax.jit, static_argnames=("tile_b",))
def mlp_forward(x, w1, b1, w2, b2, w3, b3, tile_b=2048):
    """x: [B, d_in]; weights stored [in, out]; biases [1, out]."""
    B, d_in = x.shape
    hidden = w1.shape[1]
    out_dim = w3.shape[1]
    out_dtype = x.dtype

    h_pad = _round_up(hidden, LANE)
    tb, n_tiles, b_pad = _choose_batch_tiling(B, tile_b)

    # --- BatchNorm1d statistics over the FULL real batch (training mode:
    #     biased variance, eps=1e-5, gamma=1, beta=0), folded into fc1 ---
    xf = x.astype(jnp.float32)
    mean = jnp.mean(xf, axis=0, keepdims=True)                        # [1, d_in]
    var = jnp.mean(jnp.square(xf - mean), axis=0, keepdims=True)
    rstd = jax.lax.rsqrt(var + BN_EPS)
    w1f = w1.astype(jnp.float32)
    w1_fold = rstd.reshape(d_in, 1) * w1f                             # [d_in, hidden]
    b1_fold = b1.astype(jnp.float32) - (mean * rstd) @ w1f            # [1, hidden]

    # --- Pad ONLY the VMEM-resident weights/biases to 128 hidden lanes ---
    w1_p = jnp.pad(w1_fold.astype(jnp.bfloat16), ((0, 0), (0, h_pad - hidden)))
    b1_p = jnp.pad(b1_fold, ((0, 0), (0, h_pad - hidden)))
    w2_p = jnp.pad(w2.astype(jnp.bfloat16),
                   ((0, h_pad - hidden), (0, h_pad - hidden)))
    b2_p = jnp.pad(b2.astype(jnp.float32), ((0, 0), (0, h_pad - hidden)))
    w3_p = jnp.pad(w3.astype(jnp.bfloat16), ((0, h_pad - hidden), (0, 0)))
    b3_p = b3.astype(jnp.float32)

    # x only gets batch-row padding (if B isn't a multiple of the tile rows).
    x_p = xf if b_pad == B else jnp.pad(xf, ((0, b_pad - B), (0, 0)))

    # --- Cost estimate (real dims) + VMEM budget (clamped below v7x 64 MiB) ---
    flops = 2 * B * (d_in * hidden + hidden * hidden + hidden * out_dim)
    w_bytes = 2 * (d_in * h_pad + h_pad * h_pad + h_pad * out_dim)    # bf16
    small_bytes = 4 * (2 * h_pad + out_dim)                           # biases
    bytes_accessed = 4 * B * d_in + 4 * B * out_dim + w_bytes + small_bytes
    cost = pl.CostEstimate(flops=flops, transcendentals=0,
                           bytes_accessed=bytes_accessed)

    vmem_est = (2 * tb * (d_in + out_dim) * 4        # double-buffered x / out
                + w_bytes + small_bytes              # resident weights / biases
                + 4 * tb * h_pad * 4)                # f32/bf16 intermediates
    vmem_limit = int(min(max(2 * vmem_est, 16 << 20), 48 << 20))

    out_p = pl.pallas_call(
        _mlp_kernel,
        out_shape=jax.ShapeDtypeStruct((b_pad, out_dim), out_dtype),
        grid=(n_tiles,),
        in_specs=[
            pl.BlockSpec((tb, d_in), lambda i: (i, 0)),        # x tile (unpadded)
            pl.BlockSpec((d_in, h_pad), lambda i: (0, 0)),     # w1 (BN folded)
            pl.BlockSpec((1, h_pad), lambda i: (0, 0)),        # b1
            pl.BlockSpec((h_pad, h_pad), lambda i: (0, 0)),    # w2
            pl.BlockSpec((1, h_pad), lambda i: (0, 0)),        # b2
            pl.BlockSpec((h_pad, out_dim), lambda i: (0, 0)),  # w3
            pl.BlockSpec((1, out_dim), lambda i: (0, 0)),      # b3
        ],
        out_specs=pl.BlockSpec((tb, out_dim), lambda i: (i, 0)),
        compiler_params=pltpu.CompilerParams(
            dimension_semantics=("parallel",),
            vmem_limit_bytes=vmem_limit,
        ),
        cost_estimate=cost,
    )(x_p, w1_p, b1_p, w2_p, b2_p, w3_p, b3_p)

    return out_p if b_pad == B else out_p[:B]


def init_params(key, input_dim, hidden_dim, out_dim):
    """Deterministic init mimicking nn.Linear default: U(-1/sqrt(fan_in), +)."""
    keys = jax.random.split(key, 6)

    def linear(kw, kb, fan_in, fan_out):
        bound = 1.0 / jnp.sqrt(fan_in)
        w = jax.random.uniform(kw, (fan_in, fan_out), jnp.float32, -bound, bound)
        b = jax.random.uniform(kb, (1, fan_out), jnp.float32, -bound, bound)
        return w, b

    w1, b1 = linear(keys[0], keys[1], input_dim, hidden_dim)
    w2, b2 = linear(keys[2], keys[3], hidden_dim, hidden_dim)
    w3, b3 = linear(keys[4], keys[5], hidden_dim, out_dim)
    return w1, b1, w2, b2, w3, b3


def reference_forward_quantized(x, w1, b1, w2, b2, w3, b3):
    """Pure-JAX reference matching the kernel's folded-BN / bf16-operand path."""
    xf = x.astype(jnp.float32)
    mean = jnp.mean(xf, axis=0, keepdims=True)
    var = jnp.mean((xf - mean) ** 2, axis=0, keepdims=True)
    rstd = jax.lax.rsqrt(var + BN_EPS)
    d_in = x.shape[1]
    w1_fold = rstd.reshape(d_in, 1) * w1
    b1_fold = b1 - (mean * rstd) @ w1

    def q(a):  # bf16 operand quantization, math in f32
        return a.astype(jnp.bfloat16).astype(jnp.float32)

    h1 = jnp.maximum(jnp.dot(q(xf), q(w1_fold)) + b1_fold, 0.0)
    h2 = jnp.maximum(jnp.dot(q(h1), q(w2)) + b2, 0.0)
    return jnp.dot(q(h2), q(w3)) + b3


def reference_forward_f32(x, w1, b1, w2, b2, w3, b3):
    """Exact PyTorch-module math in f32 (BatchNorm1d training mode, ReLU MLP)."""
    xf = x.astype(jnp.float32)
    mean = jnp.mean(xf, axis=0, keepdims=True)
    var = jnp.mean((xf - mean) ** 2, axis=0, keepdims=True)
    xn = (xf - mean) * jax.lax.rsqrt(var + BN_EPS)
    h1 = jnp.maximum(xn @ w1 + b1, 0.0)
    h2 = jnp.maximum(h1 @ w2 + b2, 0.0)
    return h2 @ w3 + b3


if __name__ == "__main__":
    # Small shapes consistent with the module's forward (hidden_dim default 64).
    B, INPUT_DIM, HIDDEN_DIM, OUT_DIM = 8, 16, 64, 8

    key = jax.random.PRNGKey(0)
    kx, kp = jax.random.split(key)
    x = jax.random.normal(kx, (B, INPUT_DIM), jnp.float32)
    params = init_params(kp, INPUT_DIM, HIDDEN_DIM, OUT_DIM)

    out = jax.block_until_ready(mlp_forward(x, *params))
    assert out.shape == (B, OUT_DIM)

    # Exact check against the same bf16-operand / folded-BN math...
    ref_q = reference_forward_quantized(x, *params)
    assert jnp.allclose(out, ref_q, atol=1e-2, rtol=1e-2), float(
        jnp.max(jnp.abs(out - ref_q)))
    # ...and a looser check against the true f32 PyTorch-module math.
    ref_f = reference_forward_f32(x, *params)
    assert jnp.allclose(out, ref_f, atol=5e-2, rtol=5e-2), float(
        jnp.max(jnp.abs(out - ref_f)))

    print("KERNEL_OK")
</pallas_src>

<mosaic_0001>
module attributes {stable_mosaic.version = 11 : i64} {
  func.func @_mlp_kernel(%arg0: i32, %arg1: memref<8x16xf32, #tpu.memory_space<vmem>>, %arg2: memref<16x128xbf16, #tpu.memory_space<vmem>>, %arg3: memref<1x128xf32, #tpu.memory_space<vmem>>, %arg4: memref<128x128xbf16, #tpu.memory_space<vmem>>, %arg5: memref<1x128xf32, #tpu.memory_space<vmem>>, %arg6: memref<128x8xbf16, #tpu.memory_space<vmem>>, %arg7: memref<1x8xf32, #tpu.memory_space<vmem>>, %arg8: memref<8x8xf32, #tpu.memory_space<vmem>>) attributes {dimension_semantics = [#tpu.dimension_semantics<parallel>], iteration_bounds = array<i64: 1>, scalar_prefetch = 0 : i64, scratch_operands = 0 : i64, tpu.core_type = #tpu.core_type<tc>, window_params = [{transform_indices = @transform_0, window_bounds = array<i64: 8, 16>}, {pipeline_mode = #tpu.pipeline_mode<synchronous>, transform_indices = @transform_1, window_bounds = array<i64: 16, 128>}, {pipeline_mode = #tpu.pipeline_mode<synchronous>, transform_indices = @transform_2, window_bounds = array<i64: 1, 128>}, {pipeline_mode = #tpu.pipeline_mode<synchronous>, transform_indices = @transform_3, window_bounds = array<i64: 128, 128>}, {pipeline_mode = #tpu.pipeline_mode<synchronous>, transform_indices = @transform_4, window_bounds = array<i64: 1, 128>}, {pipeline_mode = #tpu.pipeline_mode<synchronous>, transform_indices = @transform_5, window_bounds = array<i64: 128, 8>}, {pipeline_mode = #tpu.pipeline_mode<synchronous>, transform_indices = @transform_6, window_bounds = array<i64: 1, 8>}, {transform_indices = @transform_7, window_bounds = array<i64: 8, 8>}]} {
    %c0 = arith.constant 0 : index
    %c0_0 = arith.constant 0 : index
    %0 = vector.load %arg1[%c0, %c0_0] : memref<8x16xf32, #tpu.memory_space<vmem>>, vector<8x16xf32>
    %1 = arith.truncf %0 : vector<8x16xf32> to vector<8x16xbf16>
    %c0_1 = arith.constant 0 : index
    %c0_2 = arith.constant 0 : index
    %2 = vector.load %arg2[%c0_1, %c0_2] : memref<16x128xbf16, #tpu.memory_space<vmem>>, vector<16x128xbf16>
    %cst = arith.constant dense<0.000000e+00> : vector<8x128xf32>
    %3 = tpu.matmul %1, %2, %cst {dimension_numbers = #tpu.dot_dimension_numbers<[1], [0], [0], [1], [0, 0, 1, 1], [], []>} : vector<8x16xbf16>, vector<16x128xbf16>, vector<8x128xf32> -> vector<8x128xf32>
    %c0_3 = arith.constant 0 : index
    %c0_4 = arith.constant 0 : index
    %4 = vector.load %arg3[%c0_3, %c0_4] : memref<1x128xf32, #tpu.memory_space<vmem>>, vector<1x128xf32>
    %5 = vector.broadcast %4 : vector<1x128xf32> to vector<8x128xf32>
    %6 = arith.addf %3, %5 : vector<8x128xf32>
    %cst_5 = arith.constant 0.000000e+00 : f32
    %7 = vector.broadcast %cst_5 : f32 to vector<8x128xf32>
    %8 = arith.maximumf %6, %7 : vector<8x128xf32>
    %9 = arith.truncf %8 : vector<8x128xf32> to vector<8x128xbf16>
    %c0_6 = arith.constant 0 : index
    %c0_7 = arith.constant 0 : index
    %10 = vector.load %arg4[%c0_6, %c0_7] : memref<128x128xbf16, #tpu.memory_space<vmem>>, vector<128x128xbf16>
    %cst_8 = arith.constant dense<0.000000e+00> : vector<8x128xf32>
    %11 = tpu.matmul %9, %10, %cst_8 {dimension_numbers = #tpu.dot_dimension_numbers<[1], [0], [0], [1], [0, 0, 1, 1], [], []>} : vector<8x128xbf16>, vector<128x128xbf16>, vector<8x128xf32> -> vector<8x128xf32>
    %c0_9 = arith.constant 0 : index
    %c0_10 = arith.constant 0 : index
    %12 = vector.load %arg5[%c0_9, %c0_10] : memref<1x128xf32, #tpu.memory_space<vmem>>, vector<1x128xf32>
    %13 = vector.broadcast %12 : vector<1x128xf32> to vector<8x128xf32>
    %14 = arith.addf %11, %13 : vector<8x128xf32>
    %cst_11 = arith.constant 0.000000e+00 : f32
    %15 = vector.broadcast %cst_11 : f32 to vector<8x128xf32>
    %16 = arith.maximumf %14, %15 : vector<8x128xf32>
    %17 = arith.truncf %16 : vector<8x128xf32> to vector<8x128xbf16>
    %c0_12 = arith.constant 0 : index
    %c0_13 = arith.constant 0 : index
    %18 = vector.load %arg6[%c0_12, %c0_13] : memref<128x8xbf16, #tpu.memory_space<vmem>>, vector<128x8xbf16>
    %cst_14 = arith.constant dense<0.000000e+00> : vector<8x8xf32>
    %19 = tpu.matmul %17, %18, %cst_14 {dimension_numbers = #tpu.dot_dimension_numbers<[1], [0], [0], [1], [0, 0, 1, 1], [], []>} : vector<8x128xbf16>, vector<128x8xbf16>, vector<8x8xf32> -> vector<8x8xf32>
    %c0_15 = arith.constant 0 : index
    %c0_16 = arith.constant 0 : index
    %20 = vector.load %arg7[%c0_15, %c0_16] : memref<1x8xf32, #tpu.memory_space<vmem>>, vector<1x8xf32>
    %21 = vector.broadcast %20 : vector<1x8xf32> to vector<8x8xf32>
    %22 = arith.addf %19, %21 : vector<8x8xf32>
    %c0_17 = arith.constant 0 : index
    %c0_18 = arith.constant 0 : index
    %23 = vector.load %arg8[%c0_17, %c0_18] : memref<8x8xf32, #tpu.memory_space<vmem>>, vector<8x8xf32>
    tpu.vector_store %arg8[%c0_17, %c0_18], %22 {strides = array<i32>} : memref<8x8xf32, #tpu.memory_space<vmem>>, vector<8x8xf32>,
    return
  }
  func.func @transform_0(%arg0: i32) -> (i32, i32) {
    %c0_i32 = arith.constant 0 : i32
    %c0_i32_0 = arith.constant 0 : i32
    return %arg0, %c0_i32 : i32, i32
  }
  func.func @transform_1(%arg0: i32) -> (i32, i32) {
    %c0_i32 = arith.constant 0 : i32
    %c0_i32_0 = arith.constant 0 : i32
    %c0_i32_1 = arith.constant 0 : i32
    return %c0_i32, %c0_i32_0 : i32, i32
  }
  func.func @transform_2(%arg0: i32) -> (i32, i32) {
    %c0_i32 = arith.constant 0 : i32
    %c0_i32_0 = arith.constant 0 : i32
    %c0_i32_1 = arith.constant 0 : i32
    return %c0_i32, %c0_i32_0 : i32, i32
  }
  func.func @transform_3(%arg0: i32) -> (i32, i32) {
    %c0_i32 = arith.constant 0 : i32
    %c0_i32_0 = arith.constant 0 : i32
    %c0_i32_1 = arith.constant 0 : i32
    return %c0_i32, %c0_i32_0 : i32, i32
  }
  func.func @transform_4(%arg0: i32) -> (i32, i32) {
    %c0_i32 = arith.constant 0 : i32
    %c0_i32_0 = arith.constant 0 : i32
    %c0_i32_1 = arith.constant 0 : i32
    return %c0_i32, %c0_i32_0 : i32, i32
  }
  func.func @transform_5(%arg0: i32) -> (i32, i32) {
    %c0_i32 = arith.constant 0 : i32
    %c0_i32_0 = arith.constant 0 : i32
    %c0_i32_1 = arith.constant 0 : i32
    return %c0_i32, %c0_i32_0 : i32, i32
  }
  func.func @transform_6(%arg0: i32) -> (i32, i32) {
    %c0_i32 = arith.constant 0 : i32
    %c0_i32_0 = arith.constant 0 : i32
    %c0_i32_1 = arith.constant 0 : i32
    return %c0_i32, %c0_i32_0 : i32, i32
  }
  func.func @transform_7(%arg0: i32) -> (i32, i32) {
    %c0_i32 = arith.constant 0 : i32
    %c0_i32_0 = arith.constant 0 : i32
    return %arg0, %c0_i32 : i32, i32
  }
}

</mosaic_0001>

<llo_original>
// kernel: mlp_forward.1
$region0: #{mlp_forward.1}
  #allocation0 [shape = 'u32[]', space=smem, size = 0x4, offset = 0x4, fixed_abs, tag = 'smem constant byte address 0x4 - core index']
  #allocation1 [shape = 'u32[72,128]{1,0:T(1,128)}', space=vmem, size = 0x9000, scoped, tag = 'internal scratch']
  %s0 = inlined_call_operand.vmem [shape: f32[8,16], index: 0, kind: input, shape index: {}]
  %s1 = inlined_call_operand.vmem [shape: bf16[16,128], index: 1, kind: input, shape index: {}]
  %s2 = inlined_call_operand.vmem [shape: f32[1,128], index: 2, kind: input, shape index: {}]
  %s3 = inlined_call_operand.vmem [shape: bf16[128,128], index: 3, kind: input, shape index: {}]
  %s4 = inlined_call_operand.vmem [shape: f32[1,128], index: 4, kind: input, shape index: {}]
  %s5 = inlined_call_operand.vmem [shape: bf16[128,8], index: 5, kind: input, shape index: {}]
  %s6 = inlined_call_operand.vmem [shape: f32[1,8], index: 6, kind: input, shape index: {}]
  %s7 = inlined_call_operand.hbm [shape: f32[8,8], index: 7, kind: output, shape index: {}]
  %s8 = sld [smem:[#allocation0]]
  $region38: #{mlp_forward.1} parent=0
    _
  %s10 = ssub.s32 1, %s8
  %s11 = scalar_select 0, %s10, %s8
  $region1: #{mlp_forward.1} parent=0
    #allocation2 [shape = 'u8[4096]{0}', space=vmem, size = 0x1000, scoped, tag = 'output window, operand 0, single buffered']
    #allocation3 [shape = 's32[1]{0}', space=sflag, size = 0x4, scoped, tag = 'scoped memory for mlp_forward.1']
    %12 = vsyncpa [#allocation3], 0
    // Predicated region
    $region2: #{mlp_forward.1} parent=1 // pred_check
      _
    $region3: #{mlp_forward.1} parent=1 // pred_check_branch
      %14 = sbr.rel (0) target = $region5
    $region4: #{mlp_forward.1} parent=1 // pred_region
      _
    $region5: #{mlp_forward.1} parent=1 // pred_fallthru
      _
    // Predicated region
    $region6: #{mlp_forward.1} parent=1 // pred_check
      _
    $region7: #{mlp_forward.1} parent=1 // pred_check_branch
      %16 = sbr.rel (0) target = $region9
    $region8: #{mlp_forward.1} parent=1 // pred_region
      _
    $region9: #{mlp_forward.1} parent=1 // pred_fallthru
      _
    // Predicated region
    $region10: #{mlp_forward.1} parent=1 // pred_check
      _
    $region11: #{mlp_forward.1} parent=1 // pred_check_branch
      %18 = sbr.rel (0) target = $region13
    $region12: #{mlp_forward.1} parent=1 // pred_region
      _
    $region13: #{mlp_forward.1} parent=1 // pred_fallthru
      _
    // Predicated region
    $region14: #{mlp_forward.1} parent=1 // pred_check
      _
    $region15: #{mlp_forward.1} parent=1 // pred_check_branch
      %20 = sbr.rel (0) target = $region17
    $region16: #{mlp_forward.1} parent=1 // pred_region
      _
    $region17: #{mlp_forward.1} parent=1 // pred_fallthru
      _
    // Predicated region
    $region18: #{mlp_forward.1} parent=1 // pred_check
      _
    $region19: #{mlp_forward.1} parent=1 // pred_check_branch
      %22 = sbr.rel (0) target = $region21
    $region20: #{mlp_forward.1} parent=1 // pred_region
      _
    $region21: #{mlp_forward.1} parent=1 // pred_fallthru
      _
    // Predicated region
    $region22: #{mlp_forward.1} parent=1 // pred_check
      _
    $region23: #{mlp_forward.1} parent=1 // pred_check_branch
      %24 = sbr.rel (0) target = $region25
    $region24: #{mlp_forward.1} parent=1 // pred_region
      _
    $region25: #{mlp_forward.1} parent=1 // pred_fallthru
      _
    // Predicated region
    $region26: #{mlp_forward.1} parent=1 // pred_check
      _
    $region27: #{mlp_forward.1} parent=1 // pred_check_branch
      %26 = sbr.rel (0) target = $region29
    $region28: #{mlp_forward.1} parent=1 // pred_region
      _
    $region29: #{mlp_forward.1} parent=1 // pred_fallthru
      _
    %v28 = vld [vmem:[%s0] sm:$0xff]
    %v29 = vpack.c.bf16 %v28, %v28
    %v30 = vld [vmem:[%s1] sm:$0xf]
    %v31 = vld [vmem:[%s1 + $0x4] sm:$0xf]
    %v32 = vld [vmem:[%s2] sm:$0x1]
    %v34 = vperm.slane %v32, 0
    %v38 = vunpack.c.l.b16 %v30
    %v39 = vunpack.c.l.b16 %v31
    %v40 = vpack.c.b16 %v39, %v38
    %vm42 = vcmask 130048
    %v44 = vsel %vm42, %v29, 0
    %46 = vmatpush.bf16.msra.mxu0 0
    %47 = vmatpush.bf16.msra.mxu0 0
    %48 = vmatpush.bf16.msra.mxu0 0
    %49 = vmatpush.bf16.msra.mxu0 0
    %50 = vmatpush.bf16.msra.mxu0 0
    %51 = vmatpush.bf16.msra.mxu0 0
    %52 = vmatpush.bf16.msra.mxu0 0
    %53 = vmatpush.bf16.msra.mxu0 %v40
    %54 = vmatmul.bf16.gmra.mxu0 %v44
    %v55 = vpop.f32.mrf.mxu0
    %v56 = vadd.f32 %v34, %v55
    %v57 = vpop.f32.mrf.mxu0
    %58 = vdwg.mxu0
    %v59 = vmax.f32 %v56, 0.0
    %v60 = vpack.c.bf16 %v59, %v59
    %v61 = vld [vmem:[%s3] sm:$0xf]
    %v62 = vld [vmem:[%s3 + $0x4] sm:$0xf]
    %v63 = vld [vmem:[%s3 + $0x8] sm:$0xf]
    %v64 = vld [vmem:[%s3 + $0xc] sm:$0xf]
    %v65 = vld [vmem:[%s3 + $0x10] sm:$0xf]
    %v66 = vld [vmem:[%s3 + $0x14] sm:$0xf]
    %v67 = vld [vmem:[%s3 + $0x18] sm:$0xf]
    %v68 = vld [vmem:[%s3 + $0x1c] sm:$0xf]
    %v69 = vld [vmem:[%s3 + $0x20] sm:$0xf]
    %v70 = vld [vmem:[%s3 + $0x24] sm:$0xf]
    %v71 = vld [vmem:[%s3 + $0x28] sm:$0xf]
    %v72 = vld [vmem:[%s3 + $0x2c] sm:$0xf]
    %v73 = vld [vmem:[%s3 + $0x30] sm:$0xf]
    %v74 = vld [vmem:[%s3 + $0x34] sm:$0xf]
    %v75 = vld [vmem:[%s3 + $0x38] sm:$0xf]
    %v76 = vld [vmem:[%s3 + $0x3c] sm:$0xf]
    %v77 = vld [vmem:[%s4] sm:$0x1]
    %v79 = vperm.slane %v77, 0
    %v97 = vunpack.c.l.b16 %v61
    %v98 = vunpack.c.l.b16 %v62
    %v99 = vunpack.c.l.b16 %v63
    %v100 = vunpack.c.l.b16 %v64
    %v101 = vunpack.c.l.b16 %v65
    %v102 = vunpack.c.l.b16 %v66
    %v103 = vunpack.c.l.b16 %v67
    %v104 = vunpack.c.l.b16 %v68
    %v105 = vunpack.c.l.b16 %v69
    %v106 = vunpack.c.l.b16 %v70
    %v107 = vunpack.c.l.b16 %v71
    %v108 = vunpack.c.l.b16 %v72
    %v109 = vunpack.c.l.b16 %v73
    %v110 = vunpack.c.l.b16 %v74
    %v111 = vunpack.c.l.b16 %v75
    %v112 = vunpack.c.l.b16 %v76
    %v113 = vpack.c.b16 %v98, %v97
    %v114 = vpack.c.b16 %v100, %v99
    %v115 = vpack.c.b16 %v102, %v101
    %v116 = vpack.c.b16 %v104, %v103
    %v117 = vpack.c.b16 %v106, %v105
    %v118 = vpack.c.b16 %v108, %v107
    %v119 = vpack.c.b16 %v110, %v109
    %v120 = vpack.c.b16 %v112, %v111
    %129 = vmatpush.bf16.msra.mxu0 %v120
    %130 = vmatpush.bf16.msra.mxu0 %v119
    %131 = vmatpush.bf16.msra.mxu0 %v118
    %132 = vmatpush.bf16.msra.mxu0 %v117
    %133 = vmatpush.bf16.msra.mxu0 %v116
    %134 = vmatpush.bf16.msra.mxu0 %v115
    %135 = vmatpush.bf16.msra.mxu0 %v114
    %136 = vmatpush.bf16.msra.mxu0 %v113
    %137 = vmatmul.bf16.gmra.mxu0 %v60
    %v138 = vpop.f32.mrf.mxu0
    %v139 = vadd.f32 %v79, %v138
    %v140 = vpop.f32.mrf.mxu0
    %141 = vdwg.mxu0
    %v142 = vmax.f32 %v139, 0.0
    %v143 = vpack.c.bf16 %v142, %v142
    %v144 = vld [vmem:[%s5] sm:$0xf]
    %v145 = vld [vmem:[%s5 + $0x4] sm:$0xf]
    %v146 = vld [vmem:[%s5 + $0x8] sm:$0xf]
    %v147 = vld [vmem:[%s5 + $0xc] sm:$0xf]
    %v148 = vld [vmem:[%s5 + $0x10] sm:$0xf]
    %v149 = vld [vmem:[%s5 + $0x14] sm:$0xf]
    %v150 = vld [vmem:[%s5 + $0x18] sm:$0xf]
    %v151 = vld [vmem:[%s5 + $0x1c] sm:$0xf]
    %v152 = vld [vmem:[%s5 + $0x20] sm:$0xf]
    %v153 = vld [vmem:[%s5 + $0x24] sm:$0xf]
    %v154 = vld [vmem:[%s5 + $0x28] sm:$0xf]
    %v155 = vld [vmem:[%s5 + $0x2c] sm:$0xf]
    %v156 = vld [vmem:[%s5 + $0x30] sm:$0xf]
    %v157 = vld [vmem:[%s5 + $0x34] sm:$0xf]
    %v158 = vld [vmem:[%s5 + $0x38] sm:$0xf]
    %v159 = vld [vmem:[%s5 + $0x3c] sm:$0xf]
    %v160 = vld [vmem:[%s6] sm:$0x1]
    %v162 = vperm.slane %v160, 0
    %v180 = vunpack.c.l.b16 %v144
    %v181 = vunpack.c.l.b16 %v145
    %v182 = vunpack.c.l.b16 %v146
    %v183 = vunpack.c.l.b16 %v147
    %v184 = vunpack.c.l.b16 %v148
    %v185 = vunpack.c.l.b16 %v149
    %v186 = vunpack.c.l.b16 %v150
    %v187 = vunpack.c.l.b16 %v151
    %v188 = vunpack.c.l.b16 %v152
    %v189 = vunpack.c.l.b16 %v153
    %v190 = vunpack.c.l.b16 %v154
    %v191 = vunpack.c.l.b16 %v155
    %v192 = vunpack.c.l.b16 %v156
    %v193 = vunpack.c.l.b16 %v157
    %v194 = vunpack.c.l.b16 %v158
    %v195 = vunpack.c.l.b16 %v159
    %v196 = vpack.c.b16 %v181, %v180
    %v197 = vpack.c.b16 %v183, %v182
    %v198 = vpack.c.b16 %v185, %v184
    %v199 = vpack.c.b16 %v187, %v186
    %v200 = vpack.c.b16 %v189, %v188
    %v201 = vpack.c.b16 %v191, %v190
    %v202 = vpack.c.b16 %v193, %v192
    %v203 = vpack.c.b16 %v195, %v194
    %212 = vmatpush.bf16.msra.mxu0 %v203
    %213 = vmatpush.bf16.msra.mxu0 %v202
    %214 = vmatpush.bf16.msra.mxu0 %v201
    %215 = vmatpush.bf16.msra.mxu0 %v200
    %216 = vmatpush.bf16.msra.mxu0 %v199
    %217 = vmatpush.bf16.msra.mxu0 %v198
    %218 = vmatpush.bf16.msra.mxu0 %v197
    %219 = vmatpush.bf16.msra.mxu0 %v196
    %220 = vmatmul.bf16.gmra.mxu0 %v143
    %v221 = vpop.f32.mrf.mxu0
    %v222 = vadd.f32 %v162, %v221
    %v223 = vpop.f32.mrf.mxu0
    %224 = vdwg.mxu0
    %vm225 = vcmask 64512
    %226 = vst.msk [vmem:[#allocation2] sm:$0xff] %vm225, %v222
    // Predicated region
    $region30: #{mlp_forward.1} parent=1 // pred_check
      _
    $region31: #{mlp_forward.1} parent=1 // pred_check_branch
      %228 = sbr.rel (0) target = $region33
    $region32: #{mlp_forward.1} parent=1 // pred_region
      %230 = vsyncadd [#allocation3], 0
      %s232 = sshll.u32 [#allocation2], 4
      %s233 = int_to_ptr.vmem [resolvable:$true] %s232
      %s234 = sshll.u32 %s7, 4
      %s235 = int_to_ptr.hbm [resolvable:$true] %s234
      %237 = dma.vmem_to_hbm [thread:$0]  %s233, 128, %s235, [#allocation3]
    $region33: #{mlp_forward.1} parent=1 // pred_fallthru
      _
    // Predicated region
    $region34: #{mlp_forward.1} parent=1 // pred_check
      _
    $region35: #{mlp_forward.1} parent=1 // pred_check_branch
      %239 = sbr.rel (0) target = $region37
    $region36: #{mlp_forward.1} parent=1 // pred_region
      %241 = dma.done [#allocation3], 128
    $region37: #{mlp_forward.1} parent=1 // pred_fallthru
      _
    %242 = vsyncpa [#allocation3], 1

</llo_original>
